<compile_context>
chip_gen: v5e
topology: v5e:2x2
jax: 0.10.0
libtpu: 0.0.40
codegen_flags: <defaults>
</compile_context>

<pallas_src>
import math

import jax
import jax.numpy as jnp
from jax.experimental import pallas as pl
from jax.experimental.pallas import tpu as pltpu


def _round_up(n, m):
    return ((n + m - 1) // m) * m


# ----------------------------------------------------------------------------
# Pallas kernel: fused trunk + fused heads (4 matmuls, BN pre-folded)
# ----------------------------------------------------------------------------
def _predictor_kernel(x_ref, w1_ref, b1_ref, w2_ref, b2_ref,
                      wh1_ref, bh1_ref, wh2_ref, bh2_ref, out_ref):
    # x / weights are bf16; MXU accumulation and bias/ReLU epilogues are f32,
    # and each activation is written back as a single bf16 copy (no separate
    # f32 staging buffer feeding the next dot).
    h1 = jnp.dot(x_ref[...], w1_ref[...], preferred_element_type=jnp.float32)
    h1 = jnp.maximum(h1 + b1_ref[...], 0.0).astype(jnp.bfloat16)   # Linear+BN+ReLU

    h2 = jnp.dot(h1, w2_ref[...], preferred_element_type=jnp.float32)
    h2 = jnp.maximum(h2 + b2_ref[...], 0.0).astype(jnp.bfloat16)   # Linear+BN+ReLU

    h3 = jnp.dot(h2, wh1_ref[...], preferred_element_type=jnp.float32)
    h3 = jnp.maximum(h3 + bh1_ref[...], 0.0).astype(jnp.bfloat16)  # fused rot|pos hidden

    out_ref[...] = (jnp.dot(h3, wh2_ref[...], preferred_element_type=jnp.float32)
                    + bh2_ref[...]).astype(out_ref.dtype)


# ----------------------------------------------------------------------------
# Parameter construction (raw, PyTorch-default-init-style) + fold/fuse
# ----------------------------------------------------------------------------
def _linear_params(key, fan_in, fan_out):
    """nn.Linear default init: U(-1/sqrt(fan_in), 1/sqrt(fan_in)); stored (in, out)."""
    kw, kb = jax.random.split(key)
    bound = 1.0 / math.sqrt(fan_in)
    w = jax.random.uniform(kw, (fan_in, fan_out), jnp.float32, -bound, bound)
    b = jax.random.uniform(kb, (1, fan_out), jnp.float32, -bound, bound)
    return w, b


def _bn_params(num_features):
    gamma = jnp.ones((1, num_features), jnp.float32)
    beta = jnp.zeros((1, num_features), jnp.float32)
    running_mean = jnp.zeros((1, num_features), jnp.float32)
    running_var = jnp.ones((1, num_features), jnp.float32)
    return gamma, beta, running_mean, running_var


def make_raw_params(input_dim, key):
    keys = jax.random.split(key, 6)
    return {
        "lin1": _linear_params(keys[0], input_dim, 64), "bn1": _bn_params(64),
        "lin2": _linear_params(keys[1], 64, 32),        "bn2": _bn_params(32),
        "rot1": _linear_params(keys[2], 32, 16),        "bnr": _bn_params(16),
        "rot2": _linear_params(keys[3], 16, 1),
        "pos1": _linear_params(keys[4], 32, 16),        "bnp": _bn_params(16),
        "pos2": _linear_params(keys[5], 16, 2),
    }


def _fold_bn(lin, bn, eps=1e-5):
    w, b = lin
    gamma, beta, mean, var = bn
    s = gamma / jnp.sqrt(var + eps)          # (1, out)
    t = beta - mean * s
    return w * s, b * s + t


def fold_and_fuse(raw):
    """Fold eval-mode BatchNorm into the preceding Linear and fuse the two heads."""
    w1, b1 = _fold_bn(raw["lin1"], raw["bn1"])
    w2, b2 = _fold_bn(raw["lin2"], raw["bn2"])
    wr1, br1 = _fold_bn(raw["rot1"], raw["bnr"])
    wp1, bp1 = _fold_bn(raw["pos1"], raw["bnp"])
    wr2, br2 = raw["rot2"]
    wp2, bp2 = raw["pos2"]

    wh1 = jnp.concatenate([wr1, wp1], axis=1)                 # (32, 32)
    bh1 = jnp.concatenate([br1, bp1], axis=1)                 # (1, 32)
    wh2 = jnp.zeros((32, 3), jnp.float32)                     # block-diagonal
    wh2 = wh2.at[:16, 0:1].set(wr2).at[16:, 1:3].set(wp2)     # (32, 3)
    bh2 = jnp.concatenate([br2, bp2], axis=1)                 # (1, 3)
    return w1, b1, w2, b2, wh1, bh1, wh2, bh2


# ----------------------------------------------------------------------------
# Tiling / dispatch helpers
# ----------------------------------------------------------------------------
def _choose_tile(batch, tm_target, min_steps=2):
    """Balance the batch tile to the batch (<=1 sublane-group of padding),
    16-row aligned for bf16, and keep >= min_steps grid steps when the batch
    is large enough that both v7x TensorCores can get useful work."""
    n_steps = max(1, pl.cdiv(batch, tm_target))
    if n_steps < min_steps and batch >= 64 * min_steps:
        n_steps = min_steps
    tm_eff = _round_up(pl.cdiv(batch, n_steps), 16)
    padded = _round_up(batch, tm_eff)
    return tm_eff, padded


def _dense_forward(x, fused_params):
    """Plain-XLA fused dense chain (small-batch path); f32 throughout."""
    w1, b1, w2, b2, wh1, bh1, wh2, bh2 = fused_params
    h = jnp.maximum(x @ w1 + b1, 0.0)
    h = jnp.maximum(h @ w2 + b2, 0.0)
    h = jnp.maximum(h @ wh1 + bh1, 0.0)
    out = h @ wh2 + bh2
    return out[:, 0:1], out[:, 1:3]


# ----------------------------------------------------------------------------
# Wrapper
# ----------------------------------------------------------------------------
def construction_placement_predictor(x, fused_params, *, tm_target=8192,
                                     use_pallas=None, min_pallas_batch=2048):
    batch, input_dim = x.shape

    # Size-based dispatch: at tiny batches the pallas_call launch + pipeline
    # prologue dwarfs the actual math; let XLA fuse the dense chain instead.
    if use_pallas is None:
        use_pallas = batch >= min_pallas_batch
    if not use_pallas:
        return _dense_forward(x, fused_params)

    w1, b1, w2, b2, wh1, bh1, wh2, bh2 = fused_params

    # bf16 for the HBM-heavy operands; biases stay f32 (epilogues stay f32).
    weights = [w.astype(jnp.bfloat16) for w in (w1, w2, wh1, wh2)]
    biases = [b1, b2, bh1, bh2]

    # Batch-tiled grid: large, batch-balanced, 16-row-aligned tiles.
    tm_eff, padded = _choose_tile(batch, tm_target)
    x_p = x if padded == batch else jnp.pad(x, ((0, padded - batch), (0, 0)))
    x_p = x_p.astype(jnp.bfloat16)
    grid = (padded // tm_eff,)

    def pinned(a):  # full-array block, constant index_map -> stays resident in VMEM
        return pl.BlockSpec(a.shape, lambda i: (0,) * a.ndim)

    in_specs = [pl.BlockSpec((tm_eff, input_dim), lambda i: (i, 0))]
    kernel_args = []
    for w, b in zip(weights, biases):
        kernel_args += [w, b]
        in_specs += [pinned(w), pinned(b)]

    # VMEM footprint estimate (per-row): x double-buffer (bf16), one bf16 copy
    # of each activation plus its transient f32 epilogue, out double-buffer.
    per_row = (2 * input_dim * 2) + 64 * (4 + 2) + 32 * (4 + 2) + 32 * (4 + 2) + 2 * 3 * 4
    vmem_est = tm_eff * per_row + (1 << 20)  # + weights/biases/slack
    vmem_limit = None
    if vmem_est > (30 << 20):
        vmem_limit = min(_round_up(vmem_est + (4 << 20), 1 << 20), 96 << 20)

    flops = 2 * padded * (input_dim * 64 + 64 * 32 + 32 * 32 + 32 * 3)
    bytes_accessed = (
        int(x_p.size) * 2 + padded * 3 * 4
        + sum(int(w.size) * 2 for w in weights)
        + sum(int(b.size) * 4 for b in biases)
    )

    out = pl.pallas_call(
        _predictor_kernel,
        out_shape=jax.ShapeDtypeStruct((padded, 3), jnp.float32),
        grid=grid,
        in_specs=in_specs,
        out_specs=pl.BlockSpec((tm_eff, 3), lambda i: (i, 0)),
        compiler_params=pltpu.CompilerParams(
            dimension_semantics=("parallel",),
            vmem_limit_bytes=vmem_limit),
        cost_estimate=pl.CostEstimate(
            flops=flops, transcendentals=0, bytes_accessed=bytes_accessed),
    )(x_p, *kernel_args)

    out = out[:batch]
    return out[:, 0:1], out[:, 1:3]


# ----------------------------------------------------------------------------
# Pure-JAX reference (un-folded, un-fused; eval-mode module semantics)
# ----------------------------------------------------------------------------
def _reference(x, raw, eps=1e-5):
    def bn(h, p):
        gamma, beta, mean, var = p
        return (h - mean) / jnp.sqrt(var + eps) * gamma + beta

    w1, b1 = raw["lin1"]
    w2, b2 = raw["lin2"]
    h = jnp.maximum(bn(x @ w1 + b1, raw["bn1"]), 0.0)
    h = jnp.maximum(bn(h @ w2 + b2, raw["bn2"]), 0.0)

    wr1, br1 = raw["rot1"]
    wr2, br2 = raw["rot2"]
    hr = jnp.maximum(bn(h @ wr1 + br1, raw["bnr"]), 0.0)
    rot = hr @ wr2 + br2

    wp1, bp1 = raw["pos1"]
    wp2, bp2 = raw["pos2"]
    hp = jnp.maximum(bn(h @ wp1 + bp1, raw["bnp"]), 0.0)
    pos = hp @ wp2 + bp2
    return rot, pos


if __name__ == "__main__":
    input_dim = 32

    key = jax.random.PRNGKey(0)
    k_x1, k_x2, k_p = jax.random.split(key, 3)
    raw = make_raw_params(input_dim, k_p)
    fused = fold_and_fuse(raw)

    # --- Small batch: force the Pallas path so the kernel is exercised. -----
    batch = 8
    x = jax.random.normal(k_x1, (batch, input_dim), jnp.float32)
    rotation, position = construction_placement_predictor(x, fused, use_pallas=True)
    jax.block_until_ready((rotation, position))

    rot_ref, pos_ref = _reference(x, raw)
    assert rotation.shape == (batch, 1) and position.shape == (batch, 2)
    # bf16 inputs/weights/activations -> looser tolerance than pure-f32.
    assert jnp.allclose(rotation, rot_ref, atol=5e-2, rtol=5e-2)
    assert jnp.allclose(position, pos_ref, atol=5e-2, rtol=5e-2)

    # --- Modest batch with a small tm_target to exercise a multi-step grid
    #     (batch-balanced tiling + megacore-parallel batch axis). -------------
    batch2 = 200
    x2 = jax.random.normal(k_x2, (batch2, input_dim), jnp.float32)
    rot2, pos2 = construction_placement_predictor(
        x2, fused, tm_target=64, use_pallas=True)
    jax.block_until_ready((rot2, pos2))

    rot2_ref, pos2_ref = _reference(x2, raw)
    assert rot2.shape == (batch2, 1) and pos2.shape == (batch2, 2)
    assert jnp.allclose(rot2, rot2_ref, atol=5e-2, rtol=5e-2)
    assert jnp.allclose(pos2, pos2_ref, atol=5e-2, rtol=5e-2)

    print("KERNEL_OK")
</pallas_src>

<mosaic_0001>
module attributes {stable_mosaic.version = 11 : i64} {
  func.func @_predictor_kernel(%arg0: i32, %arg1: memref<16x32xbf16, #tpu.memory_space<vmem>>, %arg2: memref<32x64xbf16, #tpu.memory_space<vmem>>, %arg3: memref<1x64xf32, #tpu.memory_space<vmem>>, %arg4: memref<64x32xbf16, #tpu.memory_space<vmem>>, %arg5: memref<1x32xf32, #tpu.memory_space<vmem>>, %arg6: memref<32x32xbf16, #tpu.memory_space<vmem>>, %arg7: memref<1x32xf32, #tpu.memory_space<vmem>>, %arg8: memref<32x3xbf16, #tpu.memory_space<vmem>>, %arg9: memref<1x3xf32, #tpu.memory_space<vmem>>, %arg10: memref<16x3xf32, #tpu.memory_space<vmem>>) attributes {dimension_semantics = [#tpu.dimension_semantics<parallel>], iteration_bounds = array<i64: 1>, scalar_prefetch = 0 : i64, scratch_operands = 0 : i64, tpu.core_type = #tpu.core_type<tc>, window_params = [{transform_indices = @transform_0, window_bounds = array<i64: 16, 32>}, {pipeline_mode = #tpu.pipeline_mode<synchronous>, transform_indices = @transform_1, window_bounds = array<i64: 32, 64>}, {pipeline_mode = #tpu.pipeline_mode<synchronous>, transform_indices = @transform_2, window_bounds = array<i64: 1, 64>}, {pipeline_mode = #tpu.pipeline_mode<synchronous>, transform_indices = @transform_3, window_bounds = array<i64: 64, 32>}, {pipeline_mode = #tpu.pipeline_mode<synchronous>, transform_indices = @transform_4, window_bounds = array<i64: 1, 32>}, {pipeline_mode = #tpu.pipeline_mode<synchronous>, transform_indices = @transform_5, window_bounds = array<i64: 32, 32>}, {pipeline_mode = #tpu.pipeline_mode<synchronous>, transform_indices = @transform_6, window_bounds = array<i64: 1, 32>}, {pipeline_mode = #tpu.pipeline_mode<synchronous>, transform_indices = @transform_7, window_bounds = array<i64: 32, 3>}, {pipeline_mode = #tpu.pipeline_mode<synchronous>, transform_indices = @transform_8, window_bounds = array<i64: 1, 3>}, {transform_indices = @transform_9, window_bounds = array<i64: 16, 3>}]} {
    %c0 = arith.constant 0 : index
    %c0_0 = arith.constant 0 : index
    %0 = vector.load %arg1[%c0, %c0_0] : memref<16x32xbf16, #tpu.memory_space<vmem>>, vector<16x32xbf16>
    %c0_1 = arith.constant 0 : index
    %c0_2 = arith.constant 0 : index
    %1 = vector.load %arg2[%c0_1, %c0_2] : memref<32x64xbf16, #tpu.memory_space<vmem>>, vector<32x64xbf16>
    %cst = arith.constant dense<0.000000e+00> : vector<16x64xf32>
    %2 = tpu.matmul %0, %1, %cst {dimension_numbers = #tpu.dot_dimension_numbers<[1], [0], [0], [1], [0, 0, 1, 1], [], []>} : vector<16x32xbf16>, vector<32x64xbf16>, vector<16x64xf32> -> vector<16x64xf32>
    %c0_3 = arith.constant 0 : index
    %c0_4 = arith.constant 0 : index
    %3 = vector.load %arg3[%c0_3, %c0_4] : memref<1x64xf32, #tpu.memory_space<vmem>>, vector<1x64xf32>
    %4 = vector.broadcast %3 : vector<1x64xf32> to vector<16x64xf32>
    %5 = arith.addf %2, %4 : vector<16x64xf32>
    %cst_5 = arith.constant 0.000000e+00 : f32
    %6 = vector.broadcast %cst_5 : f32 to vector<16x64xf32>
    %7 = arith.maximumf %5, %6 : vector<16x64xf32>
    %8 = arith.truncf %7 : vector<16x64xf32> to vector<16x64xbf16>
    %c0_6 = arith.constant 0 : index
    %c0_7 = arith.constant 0 : index
    %9 = vector.load %arg4[%c0_6, %c0_7] : memref<64x32xbf16, #tpu.memory_space<vmem>>, vector<64x32xbf16>
    %cst_8 = arith.constant dense<0.000000e+00> : vector<16x32xf32>
    %10 = tpu.matmul %8, %9, %cst_8 {dimension_numbers = #tpu.dot_dimension_numbers<[1], [0], [0], [1], [0, 0, 1, 1], [], []>} : vector<16x64xbf16>, vector<64x32xbf16>, vector<16x32xf32> -> vector<16x32xf32>
    %c0_9 = arith.constant 0 : index
    %c0_10 = arith.constant 0 : index
    %11 = vector.load %arg5[%c0_9, %c0_10] : memref<1x32xf32, #tpu.memory_space<vmem>>, vector<1x32xf32>
    %12 = vector.broadcast %11 : vector<1x32xf32> to vector<16x32xf32>
    %13 = arith.addf %10, %12 : vector<16x32xf32>
    %cst_11 = arith.constant 0.000000e+00 : f32
    %14 = vector.broadcast %cst_11 : f32 to vector<16x32xf32>
    %15 = arith.maximumf %13, %14 : vector<16x32xf32>
    %16 = arith.truncf %15 : vector<16x32xf32> to vector<16x32xbf16>
    %c0_12 = arith.constant 0 : index
    %c0_13 = arith.constant 0 : index
    %17 = vector.load %arg6[%c0_12, %c0_13] : memref<32x32xbf16, #tpu.memory_space<vmem>>, vector<32x32xbf16>
    %cst_14 = arith.constant dense<0.000000e+00> : vector<16x32xf32>
    %18 = tpu.matmul %16, %17, %cst_14 {dimension_numbers = #tpu.dot_dimension_numbers<[1], [0], [0], [1], [0, 0, 1, 1], [], []>} : vector<16x32xbf16>, vector<32x32xbf16>, vector<16x32xf32> -> vector<16x32xf32>
    %c0_15 = arith.constant 0 : index
    %c0_16 = arith.constant 0 : index
    %19 = vector.load %arg7[%c0_15, %c0_16] : memref<1x32xf32, #tpu.memory_space<vmem>>, vector<1x32xf32>
    %20 = vector.broadcast %19 : vector<1x32xf32> to vector<16x32xf32>
    %21 = arith.addf %18, %20 : vector<16x32xf32>
    %cst_17 = arith.constant 0.000000e+00 : f32
    %22 = vector.broadcast %cst_17 : f32 to vector<16x32xf32>
    %23 = arith.maximumf %21, %22 : vector<16x32xf32>
    %24 = arith.truncf %23 : vector<16x32xf32> to vector<16x32xbf16>
    %c0_18 = arith.constant 0 : index
    %c0_19 = arith.constant 0 : index
    %25 = vector.load %arg8[%c0_18, %c0_19] : memref<32x3xbf16, #tpu.memory_space<vmem>>, vector<32x3xbf16>
    %cst_20 = arith.constant dense<0.000000e+00> : vector<16x3xf32>
    %26 = tpu.matmul %24, %25, %cst_20 {dimension_numbers = #tpu.dot_dimension_numbers<[1], [0], [0], [1], [0, 0, 1, 1], [], []>} : vector<16x32xbf16>, vector<32x3xbf16>, vector<16x3xf32> -> vector<16x3xf32>
    %c0_21 = arith.constant 0 : index
    %c0_22 = arith.constant 0 : index
    %27 = vector.load %arg9[%c0_21, %c0_22] : memref<1x3xf32, #tpu.memory_space<vmem>>, vector<1x3xf32>
    %28 = vector.broadcast %27 : vector<1x3xf32> to vector<16x3xf32>
    %29 = arith.addf %26, %28 : vector<16x3xf32>
    %c0_23 = arith.constant 0 : index
    %c0_24 = arith.constant 0 : index
    %30 = vector.load %arg10[%c0_23, %c0_24] : memref<16x3xf32, #tpu.memory_space<vmem>>, vector<16x3xf32>
    tpu.vector_store %arg10[%c0_23, %c0_24], %29 {strides = array<i32>} : memref<16x3xf32, #tpu.memory_space<vmem>>, vector<16x3xf32>,
    return
  }
  func.func @transform_0(%arg0: i32) -> (i32, i32) {
    %c0_i32 = arith.constant 0 : i32
    %c0_i32_0 = arith.constant 0 : i32
    return %arg0, %c0_i32 : i32, i32
  }
  func.func @transform_1(%arg0: i32) -> (i32, i32) {
    %c0_i32 = arith.constant 0 : i32
    %c0_i32_0 = arith.constant 0 : i32
    %c0_i32_1 = arith.constant 0 : i32
    return %c0_i32, %c0_i32_0 : i32, i32
  }
  func.func @transform_2(%arg0: i32) -> (i32, i32) {
    %c0_i32 = arith.constant 0 : i32
    %c0_i32_0 = arith.constant 0 : i32
    %c0_i32_1 = arith.constant 0 : i32
    return %c0_i32, %c0_i32_0 : i32, i32
  }
  func.func @transform_3(%arg0: i32) -> (i32, i32) {
    %c0_i32 = arith.constant 0 : i32
    %c0_i32_0 = arith.constant 0 : i32
    %c0_i32_1 = arith.constant 0 : i32
    return %c0_i32, %c0_i32_0 : i32, i32
  }
  func.func @transform_4(%arg0: i32) -> (i32, i32) {
    %c0_i32 = arith.constant 0 : i32
    %c0_i32_0 = arith.constant 0 : i32
    %c0_i32_1 = arith.constant 0 : i32
    return %c0_i32, %c0_i32_0 : i32, i32
  }
  func.func @transform_5(%arg0: i32) -> (i32, i32) {
    %c0_i32 = arith.constant 0 : i32
    %c0_i32_0 = arith.constant 0 : i32
    %c0_i32_1 = arith.constant 0 : i32
    return %c0_i32, %c0_i32_0 : i32, i32
  }
  func.func @transform_6(%arg0: i32) -> (i32, i32) {
    %c0_i32 = arith.constant 0 : i32
    %c0_i32_0 = arith.constant 0 : i32
    %c0_i32_1 = arith.constant 0 : i32
    return %c0_i32, %c0_i32_0 : i32, i32
  }
  func.func @transform_7(%arg0: i32) -> (i32, i32) {
    %c0_i32 = arith.constant 0 : i32
    %c0_i32_0 = arith.constant 0 : i32
    %c0_i32_1 = arith.constant 0 : i32
    return %c0_i32, %c0_i32_0 : i32, i32
  }
  func.func @transform_8(%arg0: i32) -> (i32, i32) {
    %c0_i32 = arith.constant 0 : i32
    %c0_i32_0 = arith.constant 0 : i32
    %c0_i32_1 = arith.constant 0 : i32
    return %c0_i32, %c0_i32_0 : i32, i32
  }
  func.func @transform_9(%arg0: i32) -> (i32, i32) {
    %c0_i32 = arith.constant 0 : i32
    %c0_i32_0 = arith.constant 0 : i32
    return %arg0, %c0_i32 : i32, i32
  }
}

</mosaic_0001>

<llo_original>
// kernel: tpu_custom_call.1
$region0: #{tpu_custom_call.1}
  #allocation0 [shape = 'u32[]', space=smem, size = 0x4, offset = 0x4, fixed_abs, tag = 'smem constant byte address 0x4 - core index']
  #allocation1 [shape = 'u32[72,128]{1,0:T(1,128)}', space=vmem, size = 0x9000, scoped, tag = 'internal scratch']
  %s0 = inlined_call_operand.vmem [shape: bf16[16,32], index: 0, kind: input, shape index: {}]
  %s1 = inlined_call_operand.vmem [shape: bf16[32,64], index: 1, kind: input, shape index: {}]
  %s2 = inlined_call_operand.vmem [shape: f32[1,64], index: 2, kind: input, shape index: {}]
  %s3 = inlined_call_operand.vmem [shape: bf16[64,32], index: 3, kind: input, shape index: {}]
  %s4 = inlined_call_operand.vmem [shape: f32[1,32], index: 4, kind: input, shape index: {}]
  %s5 = inlined_call_operand.vmem [shape: bf16[32,32], index: 5, kind: input, shape index: {}]
  %s6 = inlined_call_operand.vmem [shape: f32[1,32], index: 6, kind: input, shape index: {}]
  %s7 = inlined_call_operand.vmem [shape: bf16[32,3], index: 7, kind: input, shape index: {}]
  %s8 = inlined_call_operand.vmem [shape: f32[1,3], index: 8, kind: input, shape index: {}]
  %s9 = inlined_call_operand.vmem [shape: f32[16,3], index: 9, kind: output, shape index: {}]
  %s10 = sld [smem:[#allocation0]]
  $region46: #{tpu_custom_call.1} parent=0
    _
  %s12 = ssub.s32 1, %s10
  %s13 = scalar_select 0, %s12, %s10
  // Predicated region
  $region2: #{tpu_custom_call.1} parent=0 // pred_check
    _
  $region3: #{tpu_custom_call.1} parent=0 // pred_check_branch
    %15 = sbr.rel (0) target = $region5
  $region4: #{tpu_custom_call.1} parent=0 // pred_region
    _
  $region5: #{tpu_custom_call.1} parent=0 // pred_fallthru
    _
  // Predicated region
  $region6: #{tpu_custom_call.1} parent=0 // pred_check
    _
  $region7: #{tpu_custom_call.1} parent=0 // pred_check_branch
    %17 = sbr.rel (0) target = $region9
  $region8: #{tpu_custom_call.1} parent=0 // pred_region
    _
  $region9: #{tpu_custom_call.1} parent=0 // pred_fallthru
    _
  // Predicated region
  $region10: #{tpu_custom_call.1} parent=0 // pred_check
    _
  $region11: #{tpu_custom_call.1} parent=0 // pred_check_branch
    %19 = sbr.rel (0) target = $region13
  $region12: #{tpu_custom_call.1} parent=0 // pred_region
    _
  $region13: #{tpu_custom_call.1} parent=0 // pred_fallthru
    _
  // Predicated region
  $region14: #{tpu_custom_call.1} parent=0 // pred_check
    _
  $region15: #{tpu_custom_call.1} parent=0 // pred_check_branch
    %21 = sbr.rel (0) target = $region17
  $region16: #{tpu_custom_call.1} parent=0 // pred_region
    _
  $region17: #{tpu_custom_call.1} parent=0 // pred_fallthru
    _
  // Predicated region
  $region18: #{tpu_custom_call.1} parent=0 // pred_check
    _
  $region19: #{tpu_custom_call.1} parent=0 // pred_check_branch
    %23 = sbr.rel (0) target = $region21
  $region20: #{tpu_custom_call.1} parent=0 // pred_region
    _
  $region21: #{tpu_custom_call.1} parent=0 // pred_fallthru
    _
  // Predicated region
  $region22: #{tpu_custom_call.1} parent=0 // pred_check
    _
  $region23: #{tpu_custom_call.1} parent=0 // pred_check_branch
    %25 = sbr.rel (0) target = $region25
  $region24: #{tpu_custom_call.1} parent=0 // pred_region
    _
  $region25: #{tpu_custom_call.1} parent=0 // pred_fallthru
    _
  // Predicated region
  $region26: #{tpu_custom_call.1} parent=0 // pred_check
    _
  $region27: #{tpu_custom_call.1} parent=0 // pred_check_branch
    %27 = sbr.rel (0) target = $region29
  $region28: #{tpu_custom_call.1} parent=0 // pred_region
    _
  $region29: #{tpu_custom_call.1} parent=0 // pred_fallthru
    _
  // Predicated region
  $region30: #{tpu_custom_call.1} parent=0 // pred_check
    _
  $region31: #{tpu_custom_call.1} parent=0 // pred_check_branch
    %29 = sbr.rel (0) target = $region33
  $region32: #{tpu_custom_call.1} parent=0 // pred_region
    _
  $region33: #{tpu_custom_call.1} parent=0 // pred_fallthru
    _
  // Predicated region
  $region34: #{tpu_custom_call.1} parent=0 // pred_check
    _
  $region35: #{tpu_custom_call.1} parent=0 // pred_check_branch
    %31 = sbr.rel (0) target = $region37
  $region36: #{tpu_custom_call.1} parent=0 // pred_region
    _
  $region37: #{tpu_custom_call.1} parent=0 // pred_fallthru
    _
  %v33 = vld [vmem:[%s0] sm:$0xf]
  %v34 = vld [vmem:[%s0 + $0x4] sm:$0xf]
  %v35 = vld [vmem:[%s1] sm:$0xf]
  %v36 = vld [vmem:[%s1 + $0x4] sm:$0xf]
  %v37 = vld [vmem:[%s1 + $0x8] sm:$0xf]
  %v38 = vld [vmem:[%s1 + $0xc] sm:$0xf]
  %v39 = vld [vmem:[%s2] sm:$0x1]
  %v41 = vperm.slane %v39, 0
  %v45 = vunpack.c.l.b16 %v33
  %v46 = vunpack.c.l.b16 %v34
  %v47 = vpack.c.b16 %v46, %v45
  %v52 = vunpack.c.l.b16 %v35
  %v53 = vunpack.c.l.b16 %v36
  %v54 = vunpack.c.l.b16 %v37
  %v55 = vunpack.c.l.b16 %v38
  %v56 = vpack.c.b16 %v53, %v52
  %v57 = vpack.c.b16 %v55, %v54
  %vm60 = vcmask 261120
  %v62 = vsel %vm60, %v47, 0
  %64 = vmatpush.bf16.msra.mxu0 0
  %65 = vmatpush.bf16.msra.mxu0 0
  %66 = vmatpush.bf16.msra.mxu0 0
  %67 = vmatpush.bf16.msra.mxu0 0
  %68 = vmatpush.bf16.msra.mxu0 0
  %69 = vmatpush.bf16.msra.mxu0 0
  %70 = vmatpush.bf16.msra.mxu0 %v57
  %71 = vmatpush.bf16.msra.mxu0 %v56
  %72 = vmatmul.bf16.gmra.mxu0 %v62
  %v73 = vpop.f32.mrf.mxu0
  %v74 = vadd.f32 %v41, %v73
  %v75 = vpop.f32.mrf.mxu0
  %v76 = vadd.f32 %v41, %v75
  %77 = vdwg.mxu0
  %v78 = vmax.f32 %v74, 0.0
  %v79 = vmax.f32 %v76, 0.0
  %v80 = vpack.c.bf16 %v79, %v78
  %v81 = vld [vmem:[%s3] sm:$0xf]
  %v82 = vld [vmem:[%s3 + $0x4] sm:$0xf]
  %v83 = vld [vmem:[%s3 + $0x8] sm:$0xf]
  %v84 = vld [vmem:[%s3 + $0xc] sm:$0xf]
  %v85 = vld [vmem:[%s3 + $0x10] sm:$0xf]
  %v86 = vld [vmem:[%s3 + $0x14] sm:$0xf]
  %v87 = vld [vmem:[%s3 + $0x18] sm:$0xf]
  %v88 = vld [vmem:[%s3 + $0x1c] sm:$0xf]
  %v89 = vld [vmem:[%s4] sm:$0x1]
  %v91 = vperm.slane %v89, 0
  %v101 = vunpack.c.l.b16 %v81
  %v102 = vunpack.c.l.b16 %v82
  %v103 = vunpack.c.l.b16 %v83
  %v104 = vunpack.c.l.b16 %v84
  %v105 = vunpack.c.l.b16 %v85
  %v106 = vunpack.c.l.b16 %v86
  %v107 = vunpack.c.l.b16 %v87
  %v108 = vunpack.c.l.b16 %v88
  %v109 = vpack.c.b16 %v102, %v101
  %v110 = vpack.c.b16 %v104, %v103
  %v111 = vpack.c.b16 %v106, %v105
  %v112 = vpack.c.b16 %v108, %v107
  %vm117 = vcmask 523264
  %v119 = vsel %vm117, %v80, 0
  %121 = vmatpush.bf16.msra.mxu0 0
  %122 = vmatpush.bf16.msra.mxu0 0
  %123 = vmatpush.bf16.msra.mxu0 0
  %124 = vmatpush.bf16.msra.mxu0 0
  %125 = vmatpush.bf16.msra.mxu0 %v112
  %126 = vmatpush.bf16.msra.mxu0 %v111
  %127 = vmatpush.bf16.msra.mxu0 %v110
  %128 = vmatpush.bf16.msra.mxu0 %v109
  %129 = vmatmul.bf16.gmra.mxu0 %v119
  %v130 = vpop.f32.mrf.mxu0
  %v131 = vadd.f32 %v91, %v130
  %v132 = vpop.f32.mrf.mxu0
  %v133 = vadd.f32 %v91, %v132
  %134 = vdwg.mxu0
  %v135 = vmax.f32 %v131, 0.0
  %v136 = vmax.f32 %v133, 0.0
  %v137 = vpack.c.bf16 %v136, %v135
  %v138 = vld [vmem:[%s5] sm:$0xf]
  %v139 = vld [vmem:[%s5 + $0x4] sm:$0xf]
  %v140 = vld [vmem:[%s5 + $0x8] sm:$0xf]
  %v141 = vld [vmem:[%s5 + $0xc] sm:$0xf]
  %v142 = vld [vmem:[%s6] sm:$0x1]
  %v144 = vperm.slane %v142, 0
  %v150 = vunpack.c.l.b16 %v138
  %v151 = vunpack.c.l.b16 %v139
  %v152 = vunpack.c.l.b16 %v140
  %v153 = vunpack.c.l.b16 %v141
  %v154 = vpack.c.b16 %v151, %v150
  %v155 = vpack.c.b16 %v153, %v152
  %v159 = vsel %vm60, %v137, 0
  %161 = vmatpush.bf16.msra.mxu0 0
  %162 = vmatpush.bf16.msra.mxu0 0
  %163 = vmatpush.bf16.msra.mxu0 0
  %164 = vmatpush.bf16.msra.mxu0 0
  %165 = vmatpush.bf16.msra.mxu0 0
  %166 = vmatpush.bf16.msra.mxu0 0
  %167 = vmatpush.bf16.msra.mxu0 %v155
  %168 = vmatpush.bf16.msra.mxu0 %v154
  %169 = vmatmul.bf16.gmra.mxu0 %v159
  %v170 = vpop.f32.mrf.mxu0
  %v171 = vadd.f32 %v144, %v170
  %v172 = vpop.f32.mrf.mxu0
  %v173 = vadd.f32 %v144, %v172
  %174 = vdwg.mxu0
  %v175 = vmax.f32 %v171, 0.0
  %v176 = vmax.f32 %v173, 0.0
  %v177 = vpack.c.bf16 %v176, %v175
  %v178 = vld [vmem:[%s7] sm:$0xf]
  %v179 = vld [vmem:[%s7 + $0x4] sm:$0xf]
  %v180 = vld [vmem:[%s7 + $0x8] sm:$0xf]
  %v181 = vld [vmem:[%s7 + $0xc] sm:$0xf]
  %v182 = vld [vmem:[%s8] sm:$0x1]
  %v184 = vperm.slane %v182, 0
  %v190 = vunpack.c.l.b16 %v178
  %v191 = vunpack.c.l.b16 %v179
  %v192 = vunpack.c.l.b16 %v180
  %v193 = vunpack.c.l.b16 %v181
  %v194 = vpack.c.b16 %v191, %v190
  %v195 = vpack.c.b16 %v193, %v192
  %v199 = vsel %vm60, %v177, 0
  %201 = vmatpush.bf16.msra.mxu0 0
  %202 = vmatpush.bf16.msra.mxu0 0
  %203 = vmatpush.bf16.msra.mxu0 0
  %204 = vmatpush.bf16.msra.mxu0 0
  %205 = vmatpush.bf16.msra.mxu0 0
  %206 = vmatpush.bf16.msra.mxu0 0
  %207 = vmatpush.bf16.msra.mxu0 %v195
  %208 = vmatpush.bf16.msra.mxu0 %v194
  %209 = vmatmul.bf16.gmra.mxu0 %v199
  %v210 = vpop.f32.mrf.mxu0
  %v211 = vadd.f32 %v184, %v210
  %v212 = vpop.f32.mrf.mxu0
  %v213 = vadd.f32 %v184, %v212
  %214 = vdwg.mxu0
  %vm215 = vcmask 23552
  %216 = vst.msk [vmem:[%s9] sm:$0xff] %vm215, %v211
  %217 = vst.msk [vmem:[%s9 + $0x8] sm:$0xff] %vm215, %v213
  // Predicated region
  $region38: #{tpu_custom_call.1} parent=0 // pred_check
    _
  $region39: #{tpu_custom_call.1} parent=0 // pred_check_branch
    %219 = sbr.rel (0) target = $region41
  $region40: #{tpu_custom_call.1} parent=0 // pred_region
    _
  $region41: #{tpu_custom_call.1} parent=0 // pred_fallthru
    _
  // Predicated region
  $region42: #{tpu_custom_call.1} parent=0 // pred_check
    _
  $region43: #{tpu_custom_call.1} parent=0 // pred_check_branch
    %221 = sbr.rel (0) target = $region45
  $region44: #{tpu_custom_call.1} parent=0 // pred_region
    _
  $region45: #{tpu_custom_call.1} parent=0 // pred_fallthru
    _

</llo_original>
